<compile_context>
chip_gen: v7x
topology: tpu7x:2x2x1
jax: 0.10.0
libtpu: 0.0.40
codegen_flags: <defaults>
</compile_context>

<pallas_src>
import jax
import jax.numpy as jnp
from jax.experimental import pallas as pl
from jax.experimental.pallas import tpu as pltpu

EPS = 1e-5
VMEM_LIMIT_BYTES = 48 * 1024 * 1024  # explicit budget: > v5e/v6e scoped defaults, < v7x physical


def tree_node_kernel(x_ref, wcat_ref, b_ref, bs_ref, wsum_ref, o_ref):
    # x_ref:    (TM, C_in)        row tile (streamed)
    # wcat_ref: (C_in, 2*C_out)   [W | Ws]      (resident, constant index_map)
    # b_ref:    (1, C_out)        main bias     (resident)
    # bs_ref:   (1, C_out)        skip bias     (resident)
    # wsum_ref: (1, C_out)        colsum(W) for the post-matmul norm correction (resident)
    # o_ref:    (TM, C_out)
    c_out = o_ref.shape[-1]

    x_in = x_ref[...]
    xf = x_in.astype(jnp.float32)

    # InstanceNorm1d (affine=False, track_running_stats=False): per-row stats over the
    # last dim, biased variance, eps inside the sqrt.
    mean = jnp.mean(xf, axis=-1, keepdims=True)                   # (TM, 1)
    centered = xf - mean
    var = jnp.mean(centered * centered, axis=-1, keepdims=True)   # (TM, 1)
    s = jax.lax.rsqrt(var + EPS)                                  # (TM, 1)

    # Single dense MXU matmul feeding both branches (f32 accumulation).
    y = jnp.dot(x_in, wcat_ref[...], preferred_element_type=jnp.float32)  # (TM, 2*C_out)

    # main = ((x - mean) * s) @ W + b  ==  s*(x@W) - (s*mean)*colsum(W) + b
    main = s * y[:, :c_out] - (s * mean) * wsum_ref[...] + b_ref[...]
    skip = y[:, c_out:] + bs_ref[...]

    # signal_processing_module == tanh, then add the skip branch.
    o_ref[...] = (jnp.tanh(main) + skip).astype(o_ref.dtype)


def _round_up(n, m):
    return ((n + m - 1) // m) * m


def _sublane_quantum(dtype):
    # 8 rows for f32, 16 for bf16, 32 for int8/fp8 (sub-32-bit dtypes pack along sublanes).
    return max(8, 32 // jnp.dtype(dtype).itemsize)


def _device_tuning():
    kind = ""
    try:
        kind = jax.devices()[0].device_kind.lower()
    except Exception:
        pass
    is_v5e = ("v5e" in kind) or ("v5 lite" in kind) or ("v5litepod" in kind)
    dual_tc = "v7" in kind  # v7x: 2 TensorCores/chip, 64 MiB VMEM/TC
    tm_max = 4096 if is_v5e else 8192
    return tm_max, dual_tc


def _choose_tm(rows, dtype):
    """Largest row tile within budget, rounded to the dtype sublane quantum.

    Single-TC parts (v5e/v6e) take one maximal tile when the whole problem fits; on
    dual-TC parts (v7x) the tile is split so the 'parallel' grid has >= 2 steps.
    """
    q = _sublane_quantum(dtype)
    tm_max, dual_tc = _device_tuning()
    tm = min(tm_max, _round_up(rows, q))
    if dual_tc and tm >= 2 * q and pl.cdiv(rows, tm) < 2:
        tm = _round_up(pl.cdiv(tm, 2), q)
    return max(tm, q)


@jax.jit
def tree_node_forward(x, w, b, ws, bs):
    """x: (N, L, C_in); w/ws: (C_in, C_out); b/bs: (C_out,) or (1, C_out) -> (N, L, C_out)."""
    N, L, C_in = x.shape
    C_out = w.shape[1]
    rows = N * L
    itemsize = jnp.dtype(x.dtype).itemsize

    # One-time parameter packing (done in the wrapper, parameters stay VMEM-resident).
    wcat = jnp.concatenate([w, ws], axis=1).astype(x.dtype)        # (C_in, 2*C_out)
    wsum = jnp.sum(w.astype(jnp.float32), axis=0, keepdims=True)   # (1, C_out) = colsum(W)
    b2 = b.reshape(1, C_out).astype(jnp.float32)
    bs2 = bs.reshape(1, C_out).astype(jnp.float32)

    x2d = x.reshape(rows, C_in)                                     # no padding copy
    tm = _choose_tm(rows, x.dtype)
    grid = pl.cdiv(rows, tm)                                        # overhang masked by Pallas

    cost = pl.CostEstimate(
        flops=2 * rows * C_in * (2 * C_out)      # dense GEMM
        + 10 * rows * C_in                       # norm stats
        + 8 * rows * C_out,                      # post-matmul correction / add
        transcendentals=rows * C_out + rows,     # tanh + rsqrt
        bytes_accessed=rows * (C_in + C_out) * itemsize
        + C_in * (2 * C_out) * itemsize + 3 * C_out * 4,
    )

    out2d = pl.pallas_call(
        tree_node_kernel,
        out_shape=jax.ShapeDtypeStruct((rows, C_out), x.dtype),
        grid_spec=pltpu.PrefetchScalarGridSpec(
            num_scalar_prefetch=0,
            grid=(grid,),
            in_specs=[
                pl.BlockSpec((tm, C_in), lambda i: (i, 0)),           # x row tile (streamed)
                pl.BlockSpec((C_in, 2 * C_out), lambda i: (0, 0)),    # [W | Ws]   (resident)
                pl.BlockSpec((1, C_out), lambda i: (0, 0)),           # b          (resident)
                pl.BlockSpec((1, C_out), lambda i: (0, 0)),           # bs         (resident)
                pl.BlockSpec((1, C_out), lambda i: (0, 0)),           # colsum(W)  (resident)
            ],
            out_specs=pl.BlockSpec((tm, C_out), lambda i: (i, 0)),
        ),
        compiler_params=pltpu.CompilerParams(
            dimension_semantics=("parallel",),
            vmem_limit_bytes=VMEM_LIMIT_BYTES,
        ),
        cost_estimate=cost,
    )(x2d, wcat, b2, bs2, wsum)

    return out2d.reshape(N, L, C_out)


def reference_forward(x, w, b, ws, bs):
    xf = x.astype(jnp.float32)
    mean = jnp.mean(xf, axis=-1, keepdims=True)
    var = jnp.mean((xf - mean) ** 2, axis=-1, keepdims=True)
    xn = (xf - mean) / jnp.sqrt(var + EPS)
    out = jnp.tanh(xn @ w + b.reshape(1, -1))
    skip = xf @ ws + bs.reshape(1, -1)
    return (out + skip).astype(x.dtype)


if __name__ == "__main__":
    C_IN, C_OUT = 32, 64  # in_channels, out_channels

    key = jax.random.PRNGKey(0)
    kx1, kx2, kw, kb, kws, kbs = jax.random.split(key, 6)

    # Deterministic parameter init (uniform, PyTorch-Linear-like bound 1/sqrt(fan_in)).
    bound = 1.0 / (C_IN ** 0.5)
    w = jax.random.uniform(kw, (C_IN, C_OUT), jnp.float32, -bound, bound)
    b = jax.random.uniform(kb, (1, C_OUT), jnp.float32, -bound, bound)
    ws = jax.random.uniform(kws, (C_IN, C_OUT), jnp.float32, -bound, bound)
    bs = jax.random.uniform(kbs, (1, C_OUT), jnp.float32, -bound, bound)

    # Case 1: rows divisible by the sublane quantum; Case 2: ragged rows that exercise the
    # masked overhanging last block (no wrapper-side padding copy).
    x1 = jax.random.normal(kx1, (2, 8, C_IN), dtype=jnp.float32)
    x2 = jax.random.normal(kx2, (3, 5, C_IN), dtype=jnp.float32)

    for x in (x1, x2):
        out = tree_node_forward(x, w, b, ws, bs)
        jax.block_until_ready(out)
        ref = reference_forward(x, w, b, ws, bs)
        if not jnp.allclose(out, ref, atol=3e-5, rtol=3e-5):
            raise AssertionError("Pallas kernel disagrees with reference")

    print("KERNEL_OK")
</pallas_src>

<mosaic_0001>
module attributes {stable_mosaic.version = 11 : i64} {
  func.func @tree_node_kernel(%arg0: i32, %arg1: memref<16x32xf32, #tpu.memory_space<vmem>>, %arg2: memref<32x128xf32, #tpu.memory_space<vmem>>, %arg3: memref<1x64xf32, #tpu.memory_space<vmem>>, %arg4: memref<1x64xf32, #tpu.memory_space<vmem>>, %arg5: memref<1x64xf32, #tpu.memory_space<vmem>>, %arg6: memref<16x64xf32, #tpu.memory_space<vmem>>) attributes {dimension_semantics = [#tpu.dimension_semantics<parallel>], iteration_bounds = array<i64: 1>, scalar_prefetch = 0 : i64, scratch_operands = 0 : i64, tpu.core_type = #tpu.core_type<tc>, window_params = [{transform_indices = @transform_0, window_bounds = array<i64: 16, 32>}, {pipeline_mode = #tpu.pipeline_mode<synchronous>, transform_indices = @transform_1, window_bounds = array<i64: 32, 128>}, {pipeline_mode = #tpu.pipeline_mode<synchronous>, transform_indices = @transform_2, window_bounds = array<i64: 1, 64>}, {pipeline_mode = #tpu.pipeline_mode<synchronous>, transform_indices = @transform_3, window_bounds = array<i64: 1, 64>}, {pipeline_mode = #tpu.pipeline_mode<synchronous>, transform_indices = @transform_4, window_bounds = array<i64: 1, 64>}, {transform_indices = @transform_5, window_bounds = array<i64: 16, 64>}]} {
    %c0 = arith.constant 0 : index
    %c0_0 = arith.constant 0 : index
    %0 = vector.load %arg1[%c0, %c0_0] : memref<16x32xf32, #tpu.memory_space<vmem>>, vector<16x32xf32>
    %cst = arith.constant dense<0.000000e+00> : vector<16xf32>
    %1 = vector.multi_reduction <add>, %0, %cst [1] : vector<16x32xf32> to vector<16xf32>
    %2 = vector.shape_cast %1 : vector<16xf32> to vector<16x1xf32>
    %cst_1 = arith.constant 3.200000e+01 : f32
    %3 = vector.broadcast %cst_1 : f32 to vector<16x1xf32>
    %4 = arith.divf %2, %3 : vector<16x1xf32>
    %5 = vector.broadcast %4 : vector<16x1xf32> to vector<16x32xf32>
    %6 = arith.subf %0, %5 : vector<16x32xf32>
    %7 = arith.mulf %6, %6 : vector<16x32xf32>
    %cst_2 = arith.constant dense<0.000000e+00> : vector<16xf32>
    %8 = vector.multi_reduction <add>, %7, %cst_2 [1] : vector<16x32xf32> to vector<16xf32>
    %9 = vector.shape_cast %8 : vector<16xf32> to vector<16x1xf32>
    %cst_3 = arith.constant 3.200000e+01 : f32
    %10 = vector.broadcast %cst_3 : f32 to vector<16x1xf32>
    %11 = arith.divf %9, %10 : vector<16x1xf32>
    %cst_4 = arith.constant 9.99999974E-6 : f32
    %12 = vector.broadcast %cst_4 : f32 to vector<16x1xf32>
    %13 = arith.addf %11, %12 : vector<16x1xf32>
    %14 = math.rsqrt %13 : vector<16x1xf32>
    %c0_5 = arith.constant 0 : index
    %c0_6 = arith.constant 0 : index
    %15 = vector.load %arg2[%c0_5, %c0_6] : memref<32x128xf32, #tpu.memory_space<vmem>>, vector<32x128xf32>
    %cst_7 = arith.constant dense<0.000000e+00> : vector<16x128xf32>
    %16 = tpu.matmul %0, %15, %cst_7 {dimension_numbers = #tpu.dot_dimension_numbers<[1], [0], [0], [1], [0, 0, 1, 1], [], []>} : vector<16x32xf32>, vector<32x128xf32>, vector<16x128xf32> -> vector<16x128xf32>
    %17 = vector.extract_strided_slice %16 {offsets = [0, 0], sizes = [16, 64], strides = [1, 1]} : vector<16x128xf32> to vector<16x64xf32>
    %18 = vector.broadcast %14 : vector<16x1xf32> to vector<16x64xf32>
    %19 = arith.mulf %18, %17 : vector<16x64xf32>
    %20 = arith.mulf %14, %4 : vector<16x1xf32>
    %c0_8 = arith.constant 0 : index
    %c0_9 = arith.constant 0 : index
    %21 = vector.load %arg5[%c0_8, %c0_9] : memref<1x64xf32, #tpu.memory_space<vmem>>, vector<1x64xf32>
    %22 = vector.broadcast %20 : vector<16x1xf32> to vector<16x64xf32>
    %23 = vector.broadcast %21 : vector<1x64xf32> to vector<16x64xf32>
    %24 = arith.mulf %22, %23 : vector<16x64xf32>
    %25 = arith.subf %19, %24 : vector<16x64xf32>
    %c0_10 = arith.constant 0 : index
    %c0_11 = arith.constant 0 : index
    %26 = vector.load %arg3[%c0_10, %c0_11] : memref<1x64xf32, #tpu.memory_space<vmem>>, vector<1x64xf32>
    %27 = vector.broadcast %26 : vector<1x64xf32> to vector<16x64xf32>
    %28 = arith.addf %25, %27 : vector<16x64xf32>
    %29 = vector.extract_strided_slice %16 {offsets = [0, 64], sizes = [16, 64], strides = [1, 1]} : vector<16x128xf32> to vector<16x64xf32>
    %c0_12 = arith.constant 0 : index
    %c0_13 = arith.constant 0 : index
    %30 = vector.load %arg4[%c0_12, %c0_13] : memref<1x64xf32, #tpu.memory_space<vmem>>, vector<1x64xf32>
    %31 = vector.broadcast %30 : vector<1x64xf32> to vector<16x64xf32>
    %32 = arith.addf %29, %31 : vector<16x64xf32>
    %33 = math.tanh %28 : vector<16x64xf32>
    %34 = arith.addf %33, %32 : vector<16x64xf32>
    %c0_14 = arith.constant 0 : index
    %c0_15 = arith.constant 0 : index
    %35 = vector.load %arg6[%c0_14, %c0_15] : memref<16x64xf32, #tpu.memory_space<vmem>>, vector<16x64xf32>
    tpu.vector_store %arg6[%c0_14, %c0_15], %34 {strides = array<i32>} : memref<16x64xf32, #tpu.memory_space<vmem>>, vector<16x64xf32>,
    return
  }
  func.func @transform_0(%arg0: i32) -> (i32, i32) {
    %c0_i32 = arith.constant 0 : i32
    %c0_i32_0 = arith.constant 0 : i32
    return %arg0, %c0_i32 : i32, i32
  }
  func.func @transform_1(%arg0: i32) -> (i32, i32) {
    %c0_i32 = arith.constant 0 : i32
    %c0_i32_0 = arith.constant 0 : i32
    %c0_i32_1 = arith.constant 0 : i32
    return %c0_i32, %c0_i32_0 : i32, i32
  }
  func.func @transform_2(%arg0: i32) -> (i32, i32) {
    %c0_i32 = arith.constant 0 : i32
    %c0_i32_0 = arith.constant 0 : i32
    %c0_i32_1 = arith.constant 0 : i32
    return %c0_i32, %c0_i32_0 : i32, i32
  }
  func.func @transform_3(%arg0: i32) -> (i32, i32) {
    %c0_i32 = arith.constant 0 : i32
    %c0_i32_0 = arith.constant 0 : i32
    %c0_i32_1 = arith.constant 0 : i32
    return %c0_i32, %c0_i32_0 : i32, i32
  }
  func.func @transform_4(%arg0: i32) -> (i32, i32) {
    %c0_i32 = arith.constant 0 : i32
    %c0_i32_0 = arith.constant 0 : i32
    %c0_i32_1 = arith.constant 0 : i32
    return %c0_i32, %c0_i32_0 : i32, i32
  }
  func.func @transform_5(%arg0: i32) -> (i32, i32) {
    %c0_i32 = arith.constant 0 : i32
    %c0_i32_0 = arith.constant 0 : i32
    return %arg0, %c0_i32 : i32, i32
  }
}

</mosaic_0001>

<llo_original>
// kernel: tree_node_forward.1
$region0: #{tree_node_forward.1}
  #allocation0 [shape = 'u32[]', space=smem, size = 0x4, offset = 0x4, fixed_abs, tag = 'smem constant byte address 0x4 - core index']
  #allocation1 [shape = 'u32[144,128]{1,0:T(1,128)}', space=vmem, size = 0x12000, scoped, tag = 'internal scratch']
  %s0 = inlined_call_operand.vmem [shape: f32[16,32], index: 0, kind: input, shape index: {}]
  %s1 = inlined_call_operand.vmem [shape: f32[32,128], index: 1, kind: input, shape index: {}]
  %s2 = inlined_call_operand.vmem [shape: f32[1,64], index: 2, kind: input, shape index: {}]
  %s3 = inlined_call_operand.vmem [shape: f32[1,64], index: 3, kind: input, shape index: {}]
  %s4 = inlined_call_operand.vmem [shape: f32[1,64], index: 4, kind: input, shape index: {}]
  %s5 = inlined_call_operand.hbm [shape: f32[16,64], index: 5, kind: output, shape index: {}]
  %s6 = sld [smem:[#allocation0]]
  $region30: #{tree_node_forward.1} parent=0
    _
  %s8 = ssub.s32 1, %s6
  %s9 = scalar_select 0, %s8, %s6
  $region1: #{tree_node_forward.1} parent=0
    #allocation2 [shape = 'u8[8192]{0}', space=vmem, size = 0x2000, scoped, tag = 'output window, operand 0, single buffered']
    #allocation3 [shape = 's32[1]{0}', space=sflag, size = 0x4, scoped, tag = 'scoped memory for tree_node_forward.1']
    %10 = vsyncpa [#allocation3], 0
    // Predicated region
    $region2: #{tree_node_forward.1} parent=1 // pred_check
      _
    $region3: #{tree_node_forward.1} parent=1 // pred_check_branch
      %12 = sbr.rel (0) target = $region5
    $region4: #{tree_node_forward.1} parent=1 // pred_region
      _
    $region5: #{tree_node_forward.1} parent=1 // pred_fallthru
      _
    // Predicated region
    $region6: #{tree_node_forward.1} parent=1 // pred_check
      _
    $region7: #{tree_node_forward.1} parent=1 // pred_check_branch
      %14 = sbr.rel (0) target = $region9
    $region8: #{tree_node_forward.1} parent=1 // pred_region
      _
    $region9: #{tree_node_forward.1} parent=1 // pred_fallthru
      _
    // Predicated region
    $region10: #{tree_node_forward.1} parent=1 // pred_check
      _
    $region11: #{tree_node_forward.1} parent=1 // pred_check_branch
      %16 = sbr.rel (0) target = $region13
    $region12: #{tree_node_forward.1} parent=1 // pred_region
      _
    $region13: #{tree_node_forward.1} parent=1 // pred_fallthru
      _
    // Predicated region
    $region14: #{tree_node_forward.1} parent=1 // pred_check
      _
    $region15: #{tree_node_forward.1} parent=1 // pred_check_branch
      %18 = sbr.rel (0) target = $region17
    $region16: #{tree_node_forward.1} parent=1 // pred_region
      _
    $region17: #{tree_node_forward.1} parent=1 // pred_fallthru
      _
    // Predicated region
    $region18: #{tree_node_forward.1} parent=1 // pred_check
      _
    $region19: #{tree_node_forward.1} parent=1 // pred_check_branch
      %20 = sbr.rel (0) target = $region21
    $region20: #{tree_node_forward.1} parent=1 // pred_region
      _
    $region21: #{tree_node_forward.1} parent=1 // pred_fallthru
      _
    %v21 = vld [vmem:[%s0] sm:$0xff]
    %v22 = vld [vmem:[%s0 + $0x8] sm:$0xff]
    %vm23 = vcmask 261120
    %v24 = vsel %vm23, %v21, 0.0
    %25 = vadd.xlane.f32.xlu0 %v24
    %v26 = vpop.xlane.xlu0 %25
    %v27 = vsel %vm23, %v22, 0.0
    %28 = vadd.xlane.f32.xlu0 %v27
    %v29 = vpop.xlane.xlu0 %28
    %v30 = vrcp.pop 32.0
    %v31 = vmul.f32 %v26, %v30
    %v32 = vmul.f32 %v29, %v30
    %v33 = vsub.f32 %v21, %v31
    %v34 = vsub.f32 %v22, %v32
    %v35 = vmul.f32 %v33, %v33
    %v36 = vmul.f32 %v34, %v34
    %v37 = vsel %vm23, %v35, 0.0
    %38 = vadd.xlane.f32.xlu0 %v37
    %v39 = vpop.xlane.xlu0 %38
    %v40 = vsel %vm23, %v36, 0.0
    %41 = vadd.xlane.f32.xlu0 %v40
    %v42 = vpop.xlane.xlu0 %41
    %v43 = vmul.f32 %v39, %v30
    %v44 = vmul.f32 %v42, %v30
    %v45 = vadd.f32 %v43, 1e-05
    %v46 = vadd.f32 %v44, 1e-05
    %v47 = vrsqrt.pop %v45
    %v48 = vrsqrt.pop %v46
    %v49 = vld [vmem:[%s1] sm:$0xff]
    %v50 = vld [vmem:[%s1 + $0x8] sm:$0xff]
    %v51 = vld [vmem:[%s1 + $0x10] sm:$0xff]
    %v52 = vld [vmem:[%s1 + $0x18] sm:$0xff]
    %v54 = vsel %vm23, %v21, 0
    %v57 = vsel %vm23, %v22, 0
    %59 = vmatprep.subr.mxu0 0.0
    %60 = vmatpush1.msra.mxu0 %v49
    %61 = vmatprep.subr.mxu0 0.0
    %62 = vmatpush1.msra.mxu0 %v50
    %63 = vmatprep.subr.mxu0 0.0
    %64 = vmatpush1.msra.mxu0 %v51
    %65 = vmatprep.subr.mxu0 0.0
    %66 = vmatpush1.msra.mxu0 %v52
    %67 = vmatprep.subr.mxu0 0.0
    %68 = vmatpush1.msra.mxu0 0.0
    %69 = vmatprep.subr.mxu0 0.0
    %70 = vmatpush1.msra.mxu0 0.0
    %71 = vmatprep.subr.mxu0 0.0
    %72 = vmatpush1.msra.mxu0 0.0
    %73 = vmatprep.subr.mxu0 0.0
    %74 = vmatpush1.msra.mxu0 0.0
    %75 = vmatprep.subr.mxu0 0.0
    %76 = vmatpush1.msra.mxu0 0.0
    %77 = vmatprep.subr.mxu0 0.0
    %78 = vmatpush1.msra.mxu0 0.0
    %79 = vmatprep.subr.mxu0 0.0
    %80 = vmatpush1.msra.mxu0 0.0
    %81 = vmatprep.subr.mxu0 0.0
    %82 = vmatpush1.msra.mxu0 0.0
    %83 = vmatprep.subr.mxu0 0.0
    %84 = vmatpush1.msra.mxu0 0.0
    %85 = vmatprep.subr.mxu0 0.0
    %86 = vmatpush1.msra.mxu0 0.0
    %87 = vmatprep.subr.mxu0 0.0
    %88 = vmatpush1.msra.mxu0 0.0
    %89 = vmatprep.subr.mxu0 0.0
    %90 = vmatpush1.msra.mxu0 0.0
    %91 = vmatprep.subr.mxu0 0.0
    %92 = vmatpush1.msra.mxu0 0.0
    %93 = vmatprep.subr.mxu0 0.0
    %94 = vmatpush1.msra.mxu0 0.0
    %95 = vmatprep.subr.mxu0 0.0
    %96 = vmatpush1.msra.mxu0 0.0
    %97 = vmatprep.subr.mxu0 0.0
    %98 = vmatpush1.msra.mxu0 0.0
    %99 = vmatprep.subr.mxu0 0.0
    %100 = vmatpush1.msra.mxu0 0.0
    %101 = vmatprep.subr.mxu0 0.0
    %102 = vmatpush1.msra.mxu0 0.0
    %103 = vmatprep.subr.mxu0 0.0
    %104 = vmatpush1.msra.mxu0 0.0
    %105 = vmatprep.subr.mxu0 0.0
    %106 = vmatpush1.msra.mxu0 0.0
    %107 = vmatprep.subr.mxu0 0.0
    %108 = vmatpush1.msra.mxu0 0.0
    %109 = vmatprep.subr.mxu0 0.0
    %110 = vmatpush1.msra.mxu0 0.0
    %111 = vmatprep.subr.mxu0 0.0
    %112 = vmatpush1.msra.mxu0 0.0
    %113 = vmatprep.subr.mxu0 0.0
    %114 = vmatpush1.msra.mxu0 0.0
    %115 = vmatprep.subr.mxu0 0.0
    %116 = vmatpush1.msra.mxu0 0.0
    %117 = vmatprep.subr.mxu0 0.0
    %118 = vmatpush1.msra.mxu0 0.0
    %119 = vmatprep.subr.mxu0 0.0
    %120 = vmatpush1.msra.mxu0 0.0
    %121 = vmatprep.subr.mxu0 0.0
    %122 = vmatpush1.msra.mxu0 0.0
    %123 = vmatprep.mubr.f32.mxu0 0.0
    %124 = vmatmul.mubr.f32.gmra.mrb[0].mxu0 %v54
    %v125 = vpop.f32.mrb[0].mxu0
    %v126 = vadd.f32 0.0, %v125
    %v127 = vpop.f32.mrb[0].mxu0
    %128 = vmatprep.mubr.f32.mxu0 0.0
    %129 = vmatmul.mubr.f32.gmra.mrb[0].mxu0 %v57
    %v130 = vpop.f32.mrb[0].mxu0
    %v131 = vadd.f32 0.0, %v130
    %v132 = vpop.f32.mrb[0].mxu0
    %133 = vdwg.mxu0
    %v134 = vmul.f32 %v47, %v126
    %v135 = vmul.f32 %v48, %v131
    %v136 = vmul.f32 %v47, %v31
    %v137 = vmul.f32 %v48, %v32
    %v138 = vld [vmem:[%s4] sm:$0x1]
    %v140 = vlaneseq
    %v141 = vshrl.u32 %v140, 7
    %v142 = vsub.s32 0, %v141
    %v143 = vrot.slane %v138, %v142
    %v145 = vmul.f32 %v136, %v143
    %v146 = vmul.f32 %v137, %v143
    %v147 = vsub.f32 %v134, %v145
    %v148 = vsub.f32 %v135, %v146
    %v149 = vld [vmem:[%s2] sm:$0x1]
    %v151 = vlaneseq
    %v152 = vshrl.u32 %v151, 7
    %v153 = vsub.s32 0, %v152
    %v154 = vrot.slane %v149, %v153
    %v156 = vadd.f32 %v147, %v154
    %v157 = vadd.f32 %v148, %v154
    %v158 = vld [vmem:[%s3] sm:$0x1]
    %v160 = vlaneseq
    %v161 = vshrl.u32 %v160, 7
    %v162 = vsub.s32 0, %v161
    %v163 = vrot.slane %v158, %v162
    %164 = vrot.lane.b32.xlu0 %v163, 64
    %v165 = vpop.permute.xlu0 %164
    %v167 = vadd.f32 %v126, %v165
    %v168 = vadd.f32 %v131, %v165
    %v169 = vtanh.pop %v156
    %v170 = vtanh.pop %v157
    %173 = vrot.lane.b32.xlu0 %v167, 64
    %v174 = vpop.permute.xlu0 %173
    %175 = vrot.lane.b32.xlu0 %v168, 64
    %v176 = vpop.permute.xlu0 %175
    %v179 = vadd.f32 %v169, %v174
    %v180 = vadd.f32 %v170, %v176
    %vm181 = vcmask 523264
    %182 = vst.msk [vmem:[#allocation2] sm:$0xff] %vm181, %v179
    %183 = vst.msk [vmem:[#allocation2 + $0x8] sm:$0xff] %vm181, %v180
    // Predicated region
    $region22: #{tree_node_forward.1} parent=1 // pred_check
      _
    $region23: #{tree_node_forward.1} parent=1 // pred_check_branch
      %185 = sbr.rel (0) target = $region25
    $region24: #{tree_node_forward.1} parent=1 // pred_region
      %s187 = ssub.s32 256, 256
      %188 = vsyncadd [#allocation3], %s187
      %s189 = sshll.u32 [#allocation2], 4
      %s190 = int_to_ptr.vmem [resolvable:$true] %s189
      %195 = dma.vmem_to_hbm [thread:$0]  %s190, 256, %s5, [#allocation3], 128, 128, 8
    $region25: #{tree_node_forward.1} parent=1 // pred_fallthru
      _
    // Predicated region
    $region26: #{tree_node_forward.1} parent=1 // pred_check
      _
    $region27: #{tree_node_forward.1} parent=1 // pred_check_branch
      %197 = sbr.rel (0) target = $region29
    $region28: #{tree_node_forward.1} parent=1 // pred_region
      %198 = dma.done [#allocation3], 256
    $region29: #{tree_node_forward.1} parent=1 // pred_fallthru
      _
    %199 = vsyncpa [#allocation3], 1

</llo_original>
